<compile_context>
chip_gen: v5e
topology: v5e:2x2
jax: 0.10.0
libtpu: 0.0.40
codegen_flags: <defaults>
</compile_context>

<pallas_src>
import jax
import jax.numpy as jnp
from jax import lax
from jax.experimental import pallas as pl
from jax.experimental.pallas import tpu as pltpu


# ----------------------------- kernels ------------------------------------


def _sm_fc1_kernel(x_ref, u_ref, v_ref, b_ref, o_ref):
    # SharedMaskedFC1 (factored): y = (x @ U) @ V + b
    cdt = x_ref.dtype
    xu = jnp.dot(x_ref[...], u_ref[...],
                 preferred_element_type=jnp.float32).astype(cdt)       # (tile, R)
    y = jnp.dot(xu, v_ref[...], preferred_element_type=jnp.float32)    # (tile, Dff)
    o_ref[...] = (y + b_ref[...]).astype(o_ref.dtype)


def _sm_fc2_kernel(x_ref, u_ref, v_ref, b_ref, o_ref):
    # SharedMaskedFC2 (factored): y = (x @ V^T) @ U^T + b
    # Transposes absorbed into dot_general contraction dims (no XLU vxpose).
    cdt = x_ref.dtype
    xv = lax.dot_general(x_ref[...], v_ref[...],
                         dimension_numbers=(((1,), (1,)), ((), ())),
                         preferred_element_type=jnp.float32).astype(cdt)  # (tile, R)
    y = lax.dot_general(xv, u_ref[...],
                        dimension_numbers=(((1,), (1,)), ((), ())),
                        preferred_element_type=jnp.float32)               # (tile, D)
    o_ref[...] = (y + b_ref[...]).astype(o_ref.dtype)


def _sm_block_kernel(x_ref, u_ref, v1_ref, b1_ref, v2_ref, b2_ref, o_ref):
    """Fused SharedMaskedFC1 -> SharedMaskedFC2 for one block.

    The (tile, Dff) intermediate lives only in VMEM/vregs, never in HBM.
    """
    cdt = x_ref.dtype
    x = x_ref[...]
    u = u_ref[...]

    # FC1: h = (x @ U) @ V1 + b1
    xu = jnp.dot(x, u, preferred_element_type=jnp.float32).astype(cdt)     # (tile, R)
    h = jnp.dot(xu, v1_ref[...], preferred_element_type=jnp.float32)       # (tile, Dff)
    h = h + b1_ref[...]

    # TODO(synk): any activation / norm / residual between FC1 and FC2 belongs to
    # the deep-copied wrapped `model`, which SMModel does not define; only the
    # SharedMaskedFC1/FC2 forwards are reproduced here.

    # FC2: y = (h @ V2^T) @ U^T + b2   (transposes via contraction dims)
    hv = lax.dot_general(h.astype(cdt), v2_ref[...],
                         dimension_numbers=(((1,), (1,)), ((), ())),
                         preferred_element_type=jnp.float32).astype(cdt)   # (tile, R)
    y = lax.dot_general(hv, u,
                        dimension_numbers=(((1,), (1,)), ((), ())),
                        preferred_element_type=jnp.float32)                # (tile, D)
    o_ref[...] = (y + b2_ref[...]).astype(o_ref.dtype)


# ----------------------------- wrappers ------------------------------------


def _round_up(n, m):
    return ((n + m - 1) // m) * m


def _choose_tile(n_tokens, tile_n):
    """Row tile: multiple of 8 sublanes, capped at tile_n, covering n_tokens."""
    tile = min(tile_n, _round_up(n_tokens, 8))
    tile = _round_up(tile, 8)
    return tile, _round_up(n_tokens, tile)


def _sm_linear(kernel, x, U, V, b, out_dim, *, tile_n, compute_dtype, vmem_limit_bytes):
    """One standalone shared-low-rank masked linear (FC1 or FC2)."""
    N, in_dim = x.shape
    D, R = U.shape
    R2, Dff = V.shape
    assert R2 == R

    cdt = compute_dtype or x.dtype
    out_dtype = x.dtype
    tile, Np = _choose_tile(N, tile_n)

    xp = x if Np == N else jnp.pad(x, ((0, Np - N), (0, 0)))
    xp = xp.astype(cdt)
    Uc = U.astype(cdt)
    Vc = V.astype(cdt)
    b2 = b.reshape(1, out_dim).astype(jnp.float32)

    out = pl.pallas_call(
        kernel,
        out_shape=jax.ShapeDtypeStruct((Np, out_dim), out_dtype),
        grid_spec=pltpu.PrefetchScalarGridSpec(
            num_scalar_prefetch=0,
            grid=(Np // tile,),
            in_specs=[
                pl.BlockSpec((tile, in_dim), lambda i: (i, 0)),   # x tile
                pl.BlockSpec((D, R), lambda i: (0, 0)),           # shared U (resident)
                pl.BlockSpec((R, Dff), lambda i: (0, 0)),         # V slice
                pl.BlockSpec((1, out_dim), lambda i: (0, 0)),     # bias
            ],
            out_specs=pl.BlockSpec((tile, out_dim), lambda i: (i, 0)),
        ),
        compiler_params=pltpu.CompilerParams(
            dimension_semantics=("parallel",),
            vmem_limit_bytes=vmem_limit_bytes),
    )(xp, Uc, Vc, b2)
    return out if Np == N else out[:N]


def shared_masked_fc1(x, U, V, b, tile_n=256, compute_dtype=None, vmem_limit_bytes=None):
    """in_features < out_features branch: y = x @ (U @ V) + b."""
    return _sm_linear(_sm_fc1_kernel, x, U, V, b, V.shape[1],
                      tile_n=tile_n, compute_dtype=compute_dtype,
                      vmem_limit_bytes=vmem_limit_bytes)


def shared_masked_fc2(x, U, V, b, tile_n=256, compute_dtype=None, vmem_limit_bytes=None):
    """in_features >= out_features branch: y = x @ (U @ V).T + b."""
    return _sm_linear(_sm_fc2_kernel, x, U, V, b, U.shape[0],
                      tile_n=tile_n, compute_dtype=compute_dtype,
                      vmem_limit_bytes=vmem_limit_bytes)


def sm_block_fused(x, U, V1, b1, V2, b2, *, tile_n=256, compute_dtype=None,
                   vmem_limit_bytes=None):
    """Fused FC1 + FC2 of one block: the (N, Dff) intermediate stays on-chip."""
    N, D = x.shape
    Du, R = U.shape
    R1, Dff = V1.shape
    R2, Dff2 = V2.shape
    assert Du == D and R1 == R and R2 == R and Dff2 == Dff
    assert b1.shape == (Dff,) and b2.shape == (D,)

    cdt = compute_dtype or x.dtype
    out_dtype = x.dtype
    tile, Np = _choose_tile(N, tile_n)

    xp = x if Np == N else jnp.pad(x, ((0, Np - N), (0, 0)))
    xp = xp.astype(cdt)
    Uc, V1c, V2c = U.astype(cdt), V1.astype(cdt), V2.astype(cdt)
    b1r = b1.reshape(1, Dff).astype(jnp.float32)
    b2r = b2.reshape(1, D).astype(jnp.float32)

    out = pl.pallas_call(
        _sm_block_kernel,
        out_shape=jax.ShapeDtypeStruct((Np, D), out_dtype),
        grid_spec=pltpu.PrefetchScalarGridSpec(
            num_scalar_prefetch=0,
            grid=(Np // tile,),
            in_specs=[
                pl.BlockSpec((tile, D), lambda i: (i, 0)),    # x tile
                pl.BlockSpec((D, R), lambda i: (0, 0)),       # shared U
                pl.BlockSpec((R, Dff), lambda i: (0, 0)),     # V1
                pl.BlockSpec((1, Dff), lambda i: (0, 0)),     # b1
                pl.BlockSpec((R, Dff), lambda i: (0, 0)),     # V2
                pl.BlockSpec((1, D), lambda i: (0, 0)),       # b2
            ],
            out_specs=pl.BlockSpec((tile, D), lambda i: (i, 0)),
        ),
        compiler_params=pltpu.CompilerParams(
            dimension_semantics=("parallel",),
            vmem_limit_bytes=vmem_limit_bytes),
    )(xp, Uc, V1c, b1r, V2c, b2r)
    return out if Np == N else out[:N]


def sm_model_forward(x, params, tile_n=256, compute_dtype=None, vmem_limit_bytes=None):
    """SMModel.forward(x) where the wrapped model's MLP layers were replaced by
    SharedMaskedFC1 / SharedMaskedFC2 sharing one base U. Each block is a single
    fused Pallas call."""
    B, S, D = x.shape
    h = x.reshape(B * S, D)
    U = params["U"]
    for blk in params["blocks"]:
        h = sm_block_fused(h, U, blk["V1"], blk["b1"], blk["V2"], blk["b2"],
                           tile_n=tile_n, compute_dtype=compute_dtype,
                           vmem_limit_bytes=vmem_limit_bytes)
    return h.reshape(B, S, D)


def sm_model_reference(x, params):
    """Pure-JAX reference mirroring the PyTorch SM layer math (W materialized)."""
    B, S, D = x.shape
    h = x.reshape(B * S, D)
    U = params["U"]
    for blk in params["blocks"]:
        h = h @ (U @ blk["V1"]) + blk["b1"]          # SharedMaskedFC1
        h = h @ (U @ blk["V2"]).T + blk["b2"]        # SharedMaskedFC2
    return h.reshape(B, S, D)


def make_params(key, D, Dff, R, n_blocks):
    """Deterministic synthetic init with the shapes SMModel.__init__ produces:
    one shared U:(D,R), one V slice:(R,Dff) per replaced layer, plus biases."""
    keys = jax.random.split(key, 1 + 4 * n_blocks)
    U = 0.05 * jax.random.normal(keys[0], (D, R), jnp.float32)
    blocks = []
    for i in range(n_blocks):
        k1, k2, k3, k4 = keys[1 + 4 * i: 5 + 4 * i]
        blocks.append(dict(
            V1=0.05 * jax.random.normal(k1, (R, Dff), jnp.float32),
            b1=0.05 * jax.random.normal(k2, (Dff,), jnp.float32),
            V2=0.05 * jax.random.normal(k3, (R, Dff), jnp.float32),
            b2=0.05 * jax.random.normal(k4, (D,), jnp.float32),
        ))
    return dict(U=U, blocks=blocks)


if __name__ == "__main__":
    # Small but TPU-friendly shapes: D multiple of 128 keeps output stores lane-dense.
    B, S, D, Dff, R, n_blocks = 2, 8, 128, 512, 16, 2     # N = B*S = 16 tokens

    key = jax.random.PRNGKey(0)
    kx, kp, kx2 = jax.random.split(key, 3)
    x = jax.random.normal(kx, (B, S, D), jnp.float32)
    params = make_params(kp, D, Dff, R, n_blocks)

    # 1) Fused per-block forward, f32 compute.
    out = jax.block_until_ready(sm_model_forward(x, params))
    ref = sm_model_reference(x, params)
    assert out.shape == (B, S, D)
    assert jnp.allclose(out, ref, atol=2e-4, rtol=2e-4), "fused f32 mismatch"

    # 2) Standalone SharedMaskedFC1 / SharedMaskedFC2 kernels (one block), f32.
    h = x.reshape(B * S, D)
    blk = params["blocks"][0]
    h1 = shared_masked_fc1(h, params["U"], blk["V1"], blk["b1"])
    h2 = jax.block_until_ready(
        shared_masked_fc2(h1, params["U"], blk["V2"], blk["b2"]))
    ref_blk = (h @ (params["U"] @ blk["V1"]) + blk["b1"]) \
        @ (params["U"] @ blk["V2"]).T + blk["b2"]
    assert jnp.allclose(h2, ref_blk, atol=2e-4, rtol=2e-4), "per-layer mismatch"

    # 3) bf16-compute path (f32 accumulation) with ragged token count
    #    (exercises padding + multi-step "parallel" grid).
    B2, S2 = 4, 100                                        # N = 400 -> pad to 512
    x2 = jax.random.normal(kx2, (B2, S2, D), jnp.float32)
    out_bf16 = jax.block_until_ready(
        sm_model_forward(x2, params, compute_dtype=jnp.bfloat16))
    ref2 = sm_model_reference(x2, params)
    assert out_bf16.shape == (B2, S2, D)
    assert jnp.allclose(out_bf16, ref2, atol=3e-2, rtol=3e-2), "bf16 mismatch"

    print("KERNEL_OK")
</pallas_src>

<mosaic_0001>
module attributes {stable_mosaic.version = 11 : i64} {
  func.func @_sm_block_kernel(%arg0: i32, %arg1: memref<16x128xf32, #tpu.memory_space<vmem>>, %arg2: memref<128x16xf32, #tpu.memory_space<vmem>>, %arg3: memref<16x512xf32, #tpu.memory_space<vmem>>, %arg4: memref<1x512xf32, #tpu.memory_space<vmem>>, %arg5: memref<16x512xf32, #tpu.memory_space<vmem>>, %arg6: memref<1x128xf32, #tpu.memory_space<vmem>>, %arg7: memref<16x128xf32, #tpu.memory_space<vmem>>) attributes {dimension_semantics = [#tpu.dimension_semantics<parallel>], iteration_bounds = array<i64: 1>, scalar_prefetch = 0 : i64, scratch_operands = 0 : i64, tpu.core_type = #tpu.core_type<tc>, window_params = [{transform_indices = @transform_0, window_bounds = array<i64: 16, 128>}, {pipeline_mode = #tpu.pipeline_mode<synchronous>, transform_indices = @transform_1, window_bounds = array<i64: 128, 16>}, {pipeline_mode = #tpu.pipeline_mode<synchronous>, transform_indices = @transform_2, window_bounds = array<i64: 16, 512>}, {pipeline_mode = #tpu.pipeline_mode<synchronous>, transform_indices = @transform_3, window_bounds = array<i64: 1, 512>}, {pipeline_mode = #tpu.pipeline_mode<synchronous>, transform_indices = @transform_4, window_bounds = array<i64: 16, 512>}, {pipeline_mode = #tpu.pipeline_mode<synchronous>, transform_indices = @transform_5, window_bounds = array<i64: 1, 128>}, {transform_indices = @transform_6, window_bounds = array<i64: 16, 128>}]} {
    %c0 = arith.constant 0 : index
    %c0_0 = arith.constant 0 : index
    %0 = vector.load %arg1[%c0, %c0_0] : memref<16x128xf32, #tpu.memory_space<vmem>>, vector<16x128xf32>
    %c0_1 = arith.constant 0 : index
    %c0_2 = arith.constant 0 : index
    %1 = vector.load %arg2[%c0_1, %c0_2] : memref<128x16xf32, #tpu.memory_space<vmem>>, vector<128x16xf32>
    %cst = arith.constant dense<0.000000e+00> : vector<16x16xf32>
    %2 = tpu.matmul %0, %1, %cst {dimension_numbers = #tpu.dot_dimension_numbers<[1], [0], [0], [1], [0, 0, 1, 1], [], []>} : vector<16x128xf32>, vector<128x16xf32>, vector<16x16xf32> -> vector<16x16xf32>
    %c0_3 = arith.constant 0 : index
    %c0_4 = arith.constant 0 : index
    %3 = vector.load %arg3[%c0_3, %c0_4] : memref<16x512xf32, #tpu.memory_space<vmem>>, vector<16x512xf32>
    %cst_5 = arith.constant dense<0.000000e+00> : vector<16x512xf32>
    %4 = tpu.matmul %2, %3, %cst_5 {dimension_numbers = #tpu.dot_dimension_numbers<[1], [0], [0], [1], [0, 0, 1, 1], [], []>} : vector<16x16xf32>, vector<16x512xf32>, vector<16x512xf32> -> vector<16x512xf32>
    %c0_6 = arith.constant 0 : index
    %c0_7 = arith.constant 0 : index
    %5 = vector.load %arg4[%c0_6, %c0_7] : memref<1x512xf32, #tpu.memory_space<vmem>>, vector<1x512xf32>
    %6 = vector.broadcast %5 : vector<1x512xf32> to vector<16x512xf32>
    %7 = arith.addf %4, %6 : vector<16x512xf32>
    %c0_8 = arith.constant 0 : index
    %c0_9 = arith.constant 0 : index
    %8 = vector.load %arg5[%c0_8, %c0_9] : memref<16x512xf32, #tpu.memory_space<vmem>>, vector<16x512xf32>
    %cst_10 = arith.constant dense<0.000000e+00> : vector<16x16xf32>
    %9 = tpu.matmul %7, %8, %cst_10 {dimension_numbers = #tpu.dot_dimension_numbers<[1], [1], [0], [0], [0, 0, 1, 0], [], []>} : vector<16x512xf32>, vector<16x512xf32>, vector<16x16xf32> -> vector<16x16xf32>
    %cst_11 = arith.constant dense<0.000000e+00> : vector<16x128xf32>
    %10 = tpu.matmul %9, %1, %cst_11 {dimension_numbers = #tpu.dot_dimension_numbers<[1], [1], [0], [0], [0, 0, 1, 0], [], []>} : vector<16x16xf32>, vector<128x16xf32>, vector<16x128xf32> -> vector<16x128xf32>
    %c0_12 = arith.constant 0 : index
    %c0_13 = arith.constant 0 : index
    %11 = vector.load %arg6[%c0_12, %c0_13] : memref<1x128xf32, #tpu.memory_space<vmem>>, vector<1x128xf32>
    %12 = vector.broadcast %11 : vector<1x128xf32> to vector<16x128xf32>
    %13 = arith.addf %10, %12 : vector<16x128xf32>
    %c0_14 = arith.constant 0 : index
    %c0_15 = arith.constant 0 : index
    %14 = vector.load %arg7[%c0_14, %c0_15] : memref<16x128xf32, #tpu.memory_space<vmem>>, vector<16x128xf32>
    tpu.vector_store %arg7[%c0_14, %c0_15], %13 {strides = array<i32>} : memref<16x128xf32, #tpu.memory_space<vmem>>, vector<16x128xf32>,
    return
  }
  func.func @transform_0(%arg0: i32) -> (i32, i32) {
    %c0_i32 = arith.constant 0 : i32
    %c0_i32_0 = arith.constant 0 : i32
    return %arg0, %c0_i32 : i32, i32
  }
  func.func @transform_1(%arg0: i32) -> (i32, i32) {
    %c0_i32 = arith.constant 0 : i32
    %c0_i32_0 = arith.constant 0 : i32
    %c0_i32_1 = arith.constant 0 : i32
    return %c0_i32, %c0_i32_0 : i32, i32
  }
  func.func @transform_2(%arg0: i32) -> (i32, i32) {
    %c0_i32 = arith.constant 0 : i32
    %c0_i32_0 = arith.constant 0 : i32
    %c0_i32_1 = arith.constant 0 : i32
    return %c0_i32, %c0_i32_0 : i32, i32
  }
  func.func @transform_3(%arg0: i32) -> (i32, i32) {
    %c0_i32 = arith.constant 0 : i32
    %c0_i32_0 = arith.constant 0 : i32
    %c0_i32_1 = arith.constant 0 : i32
    return %c0_i32, %c0_i32_0 : i32, i32
  }
  func.func @transform_4(%arg0: i32) -> (i32, i32) {
    %c0_i32 = arith.constant 0 : i32
    %c0_i32_0 = arith.constant 0 : i32
    %c0_i32_1 = arith.constant 0 : i32
    return %c0_i32, %c0_i32_0 : i32, i32
  }
  func.func @transform_5(%arg0: i32) -> (i32, i32) {
    %c0_i32 = arith.constant 0 : i32
    %c0_i32_0 = arith.constant 0 : i32
    %c0_i32_1 = arith.constant 0 : i32
    return %c0_i32, %c0_i32_0 : i32, i32
  }
  func.func @transform_6(%arg0: i32) -> (i32, i32) {
    %c0_i32 = arith.constant 0 : i32
    %c0_i32_0 = arith.constant 0 : i32
    return %arg0, %c0_i32 : i32, i32
  }
}

</mosaic_0001>

<llo_original>
// kernel: tpu_custom_call.1
$region0: #{tpu_custom_call.1}
  #allocation0 [shape = 'u32[]', space=smem, size = 0x4, offset = 0x4, fixed_abs, tag = 'smem constant byte address 0x4 - core index']
  #allocation1 [shape = 'u32[72,128]{1,0:T(1,128)}', space=vmem, size = 0x9000, scoped, tag = 'internal scratch']
  %s0 = inlined_call_operand.vmem [shape: f32[16,128], index: 0, kind: input, shape index: {}]
  %s1 = inlined_call_operand.vmem [shape: f32[128,16], index: 1, kind: input, shape index: {}]
  %s2 = inlined_call_operand.vmem [shape: f32[16,512], index: 2, kind: input, shape index: {}]
  %s3 = inlined_call_operand.hbm [shape: f32[1,512], index: 3, kind: input, shape index: {}]
  %s4 = inlined_call_operand.vmem [shape: f32[16,512], index: 4, kind: input, shape index: {}]
  %s5 = inlined_call_operand.vmem [shape: f32[1,128], index: 5, kind: input, shape index: {}]
  %s6 = inlined_call_operand.hbm [shape: f32[16,128], index: 6, kind: output, shape index: {}]
  %s7 = sld [smem:[#allocation0]]
  $region38: #{tpu_custom_call.1} parent=0
    _
  %s9 = ssub.s32 1, %s7
  %s10 = scalar_select 0, %s9, %s7
  $region1: #{tpu_custom_call.1} parent=0
    #allocation2 [shape = 'u8[2048]{0}', space=vmem, size = 0x800, scoped, tag = 'input window, operand 3, single buffered']
    #allocation3 [shape = 's32[1]{0}', space=sflag, size = 0x4, scoped, tag = 'scoped memory for tpu_custom_call.1']
    #allocation4 [shape = 's32[1]{0}', space=sflag, size = 0x4, scoped, tag = 'scoped memory for tpu_custom_call.1']
    #allocation5 [shape = 'u8[8192]{0}', space=vmem, size = 0x2000, scoped, tag = 'output window, operand 0, single buffered']
    %11 = vsyncpa [#allocation3], 0
    %12 = vsyncpa [#allocation4], 0
    // Predicated region
    $region2: #{tpu_custom_call.1} parent=1 // pred_check
      _
    $region3: #{tpu_custom_call.1} parent=1 // pred_check_branch
      %14 = sbr.rel (0) target = $region5
    $region4: #{tpu_custom_call.1} parent=1 // pred_region
      _
    $region5: #{tpu_custom_call.1} parent=1 // pred_fallthru
      _
    // Predicated region
    $region6: #{tpu_custom_call.1} parent=1 // pred_check
      _
    $region7: #{tpu_custom_call.1} parent=1 // pred_check_branch
      %16 = sbr.rel (0) target = $region9
    $region8: #{tpu_custom_call.1} parent=1 // pred_region
      _
    $region9: #{tpu_custom_call.1} parent=1 // pred_fallthru
      _
    // Predicated region
    $region10: #{tpu_custom_call.1} parent=1 // pred_check
      _
    $region11: #{tpu_custom_call.1} parent=1 // pred_check_branch
      %18 = sbr.rel (0) target = $region13
    $region12: #{tpu_custom_call.1} parent=1 // pred_region
      _
    $region13: #{tpu_custom_call.1} parent=1 // pred_fallthru
      _
    // Predicated region
    $region14: #{tpu_custom_call.1} parent=1 // pred_check
      _
    $region15: #{tpu_custom_call.1} parent=1 // pred_check_branch
      %20 = sbr.rel (0) target = $region17
    $region16: #{tpu_custom_call.1} parent=1 // pred_region
      %22 = vsyncadd [#allocation3], 0
      %s24 = sshll.u32 %s3, 4
      %s25 = int_to_ptr.hbm [resolvable:$true] %s24
      %s26 = sshll.u32 [#allocation2], 4
      %s27 = int_to_ptr.vmem [resolvable:$true] %s26
      %29 = dma.hbm_to_vmem [thread:$0]  %s25, 64, %s27, [#allocation3]
    $region17: #{tpu_custom_call.1} parent=1 // pred_fallthru
      _
    // Predicated region
    $region18: #{tpu_custom_call.1} parent=1 // pred_check
      _
    $region19: #{tpu_custom_call.1} parent=1 // pred_check_branch
      %31 = sbr.rel (0) target = $region21
    $region20: #{tpu_custom_call.1} parent=1 // pred_region
      _
    $region21: #{tpu_custom_call.1} parent=1 // pred_fallthru
      _
    // Predicated region
    $region22: #{tpu_custom_call.1} parent=1 // pred_check
      _
    $region23: #{tpu_custom_call.1} parent=1 // pred_check_branch
      %33 = sbr.rel (0) target = $region25
    $region24: #{tpu_custom_call.1} parent=1 // pred_region
      _
    $region25: #{tpu_custom_call.1} parent=1 // pred_fallthru
      _
    // Predicated region
    $region26: #{tpu_custom_call.1} parent=1 // pred_check
      _
    $region27: #{tpu_custom_call.1} parent=1 // pred_check_branch
      %35 = sbr.rel (0) target = $region29
    $region28: #{tpu_custom_call.1} parent=1 // pred_region
      %37 = dma.done [#allocation3], 64
    $region29: #{tpu_custom_call.1} parent=1 // pred_fallthru
      _
    %v38 = vld [vmem:[%s0] sm:$0xff]
    %v39 = vld [vmem:[%s0 + $0x8] sm:$0xff]
    %v40 = vld [vmem:[%s1] sm:$0xff]
    %v41 = vld [vmem:[%s1 + $0x8] sm:$0xff]
    %v42 = vld [vmem:[%s1 + $0x10] sm:$0xff]
    %v43 = vld [vmem:[%s1 + $0x18] sm:$0xff]
    %v44 = vld [vmem:[%s1 + $0x20] sm:$0xff]
    %v45 = vld [vmem:[%s1 + $0x28] sm:$0xff]
    %v46 = vld [vmem:[%s1 + $0x30] sm:$0xff]
    %v47 = vld [vmem:[%s1 + $0x38] sm:$0xff]
    %v48 = vld [vmem:[%s1 + $0x40] sm:$0xff]
    %v49 = vld [vmem:[%s1 + $0x48] sm:$0xff]
    %v50 = vld [vmem:[%s1 + $0x50] sm:$0xff]
    %v51 = vld [vmem:[%s1 + $0x58] sm:$0xff]
    %v52 = vld [vmem:[%s1 + $0x60] sm:$0xff]
    %v53 = vld [vmem:[%s1 + $0x68] sm:$0xff]
    %v54 = vld [vmem:[%s1 + $0x70] sm:$0xff]
    %v55 = vld [vmem:[%s1 + $0x78] sm:$0xff]
    %56 = vmatpush.msra.mxu0 %v55
    %57 = vmatpush.msra.mxu0 %v54
    %58 = vmatpush.msra.mxu0 %v53
    %59 = vmatpush.msra.mxu0 %v52
    %60 = vmatpush.msra.mxu0 %v51
    %61 = vmatpush.msra.mxu0 %v50
    %62 = vmatpush.msra.mxu0 %v49
    %63 = vmatpush.msra.mxu0 %v48
    %64 = vmatpush.msra.mxu0 %v47
    %65 = vmatpush.msra.mxu0 %v46
    %66 = vmatpush.msra.mxu0 %v45
    %67 = vmatpush.msra.mxu0 %v44
    %68 = vmatpush.msra.mxu0 %v43
    %69 = vmatpush.msra.mxu0 %v42
    %70 = vmatpush.msra.mxu0 %v41
    %71 = vmatpush.msra.mxu0 %v40
    %72 = vmatmul.f32.gmra.mxu0 %v38
    %v73 = vpop.f32.mrf.mxu0
    %v74 = vadd.f32 0.0, %v73
    %75 = vmatmul.f32.gmra.mxu0 %v39
    %v76 = vpop.f32.mrf.mxu0
    %v77 = vadd.f32 0.0, %v76
    %78 = vdwg.mxu0
    %v79 = vld [vmem:[%s2] sm:$0xff]
    %v80 = vld [vmem:[%s2 + $0x8] sm:$0xff]
    %v81 = vld [vmem:[%s2 + $0x10] sm:$0xff]
    %v82 = vld [vmem:[%s2 + $0x18] sm:$0xff]
    %v83 = vld [vmem:[%s2 + $0x20] sm:$0xff]
    %v84 = vld [vmem:[%s2 + $0x28] sm:$0xff]
    %v85 = vld [vmem:[%s2 + $0x30] sm:$0xff]
    %v86 = vld [vmem:[%s2 + $0x38] sm:$0xff]
    %v87 = vld [vmem:[#allocation2] sm:$0xf]
    %v89 = vperm.slane %v87, 0
    %v90 = vperm.slane %v87, 1
    %v91 = vperm.slane %v87, 2
    %v92 = vperm.slane %v87, 3
    %vm97 = vcmask 130048
    %v99 = vsel %vm97, %v74, 0
    %v102 = vsel %vm97, %v77, 0
    %104 = vmatpush.msra.mxu0 0.0
    %105 = vmatpush.msra.mxu0 0.0
    %106 = vmatpush.msra.mxu0 0.0
    %107 = vmatpush.msra.mxu0 0.0
    %108 = vmatpush.msra.mxu0 0.0
    %109 = vmatpush.msra.mxu0 0.0
    %110 = vmatpush.msra.mxu0 0.0
    %111 = vmatpush.msra.mxu0 0.0
    %112 = vmatpush.msra.mxu0 0.0
    %113 = vmatpush.msra.mxu0 0.0
    %114 = vmatpush.msra.mxu0 0.0
    %115 = vmatpush.msra.mxu0 0.0
    %116 = vmatpush.msra.mxu0 0.0
    %117 = vmatpush.msra.mxu0 0.0
    %118 = vmatpush.msra.mxu0 %v83
    %119 = vmatpush.msra.mxu0 %v79
    %120 = vmatmul.f32.gmra.mxu0 %v99
    %v121 = vpop.f32.mrf.mxu0
    %v122 = vadd.f32 %v89, %v121
    %123 = vmatmul.f32.gmra.mxu0 %v102
    %v124 = vpop.f32.mrf.mxu0
    %v125 = vadd.f32 %v89, %v124
    %126 = vdwg.mxu0
    %127 = vmatpush.msra.mxu0 0.0
    %128 = vmatpush.msra.mxu0 0.0
    %129 = vmatpush.msra.mxu0 0.0
    %130 = vmatpush.msra.mxu0 0.0
    %131 = vmatpush.msra.mxu0 0.0
    %132 = vmatpush.msra.mxu0 0.0
    %133 = vmatpush.msra.mxu0 0.0
    %134 = vmatpush.msra.mxu0 0.0
    %135 = vmatpush.msra.mxu0 0.0
    %136 = vmatpush.msra.mxu0 0.0
    %137 = vmatpush.msra.mxu0 0.0
    %138 = vmatpush.msra.mxu0 0.0
    %139 = vmatpush.msra.mxu0 0.0
    %140 = vmatpush.msra.mxu0 0.0
    %141 = vmatpush.msra.mxu0 %v84
    %142 = vmatpush.msra.mxu0 %v80
    %143 = vmatmul.f32.gmra.mxu0 %v99
    %v144 = vpop.f32.mrf.mxu0
    %v145 = vadd.f32 %v90, %v144
    %146 = vmatmul.f32.gmra.mxu0 %v102
    %v147 = vpop.f32.mrf.mxu0
    %v148 = vadd.f32 %v90, %v147
    %149 = vdwg.mxu0
    %150 = vmatpush.msra.mxu0 0.0
    %151 = vmatpush.msra.mxu0 0.0
    %152 = vmatpush.msra.mxu0 0.0
    %153 = vmatpush.msra.mxu0 0.0
    %154 = vmatpush.msra.mxu0 0.0
    %155 = vmatpush.msra.mxu0 0.0
    %156 = vmatpush.msra.mxu0 0.0
    %157 = vmatpush.msra.mxu0 0.0
    %158 = vmatpush.msra.mxu0 0.0
    %159 = vmatpush.msra.mxu0 0.0
    %160 = vmatpush.msra.mxu0 0.0
    %161 = vmatpush.msra.mxu0 0.0
    %162 = vmatpush.msra.mxu0 0.0
    %163 = vmatpush.msra.mxu0 0.0
    %164 = vmatpush.msra.mxu0 %v85
    %165 = vmatpush.msra.mxu0 %v81
    %166 = vmatmul.f32.gmra.mxu0 %v99
    %v167 = vpop.f32.mrf.mxu0
    %v168 = vadd.f32 %v91, %v167
    %169 = vmatmul.f32.gmra.mxu0 %v102
    %v170 = vpop.f32.mrf.mxu0
    %v171 = vadd.f32 %v91, %v170
    %172 = vdwg.mxu0
    %173 = vmatpush.msra.mxu0 0.0
    %174 = vmatpush.msra.mxu0 0.0
    %175 = vmatpush.msra.mxu0 0.0
    %176 = vmatpush.msra.mxu0 0.0
    %177 = vmatpush.msra.mxu0 0.0
    %178 = vmatpush.msra.mxu0 0.0
    %179 = vmatpush.msra.mxu0 0.0
    %180 = vmatpush.msra.mxu0 0.0
    %181 = vmatpush.msra.mxu0 0.0
    %182 = vmatpush.msra.mxu0 0.0
    %183 = vmatpush.msra.mxu0 0.0
    %184 = vmatpush.msra.mxu0 0.0
    %185 = vmatpush.msra.mxu0 0.0
    %186 = vmatpush.msra.mxu0 0.0
    %187 = vmatpush.msra.mxu0 %v86
    %188 = vmatpush.msra.mxu0 %v82
    %189 = vmatmul.f32.gmra.mxu0 %v99
    %v190 = vpop.f32.mrf.mxu0
    %v191 = vadd.f32 %v92, %v190
    %192 = vmatmul.f32.gmra.mxu0 %v102
    %v193 = vpop.f32.mrf.mxu0
    %v194 = vadd.f32 %v92, %v193
    %195 = vdwg.mxu0
    %v196 = vld [vmem:[%s4] sm:$0xff]
    %v197 = vld [vmem:[%s4 + $0x8] sm:$0xff]
    %v198 = vld [vmem:[%s4 + $0x10] sm:$0xff]
    %v199 = vld [vmem:[%s4 + $0x18] sm:$0xff]
    %v200 = vld [vmem:[%s4 + $0x20] sm:$0xff]
    %v201 = vld [vmem:[%s4 + $0x28] sm:$0xff]
    %v202 = vld [vmem:[%s4 + $0x30] sm:$0xff]
    %v203 = vld [vmem:[%s4 + $0x38] sm:$0xff]
    %204 = vmatpush.xpose.msra.mxu0 0.0
    %205 = vmatpush.xpose.msra.mxu0 0.0
    %206 = vmatpush.xpose.msra.mxu0 0.0
    %207 = vmatpush.xpose.msra.mxu0 0.0
    %208 = vmatpush.xpose.msra.mxu0 0.0
    %209 = vmatpush.xpose.msra.mxu0 0.0
    %210 = vmatpush.xpose.msra.mxu0 0.0
    %211 = vmatpush.xpose.msra.mxu0 0.0
    %212 = vmatpush.xpose.msra.mxu0 0.0
    %213 = vmatpush.xpose.msra.mxu0 0.0
    %214 = vmatpush.xpose.msra.mxu0 0.0
    %215 = vmatpush.xpose.msra.mxu0 0.0
    %216 = vmatpush.xpose.msra.mxu0 0.0
    %217 = vmatpush.xpose.msra.mxu0 0.0
    %218 = vmatpush.xpose.msra.mxu0 %v200
    %219 = vmatpush.xpose.msra.mxu0 %v196
    %220 = vmatmul.f32.gmra.mxu0 %v122
    %v221 = vpop.f32.mrf.mxu0
    %v222 = vadd.f32 0.0, %v221
    %223 = vmatmul.f32.gmra.mxu0 %v125
    %v224 = vpop.f32.mrf.mxu0
    %v225 = vadd.f32 0.0, %v224
    %226 = vdwg.mxu0
    %227 = vmatpush.xpose.msra.mxu0 0.0
    %228 = vmatpush.xpose.msra.mxu0 0.0
    %229 = vmatpush.xpose.msra.mxu0 0.0
    %230 = vmatpush.xpose.msra.mxu0 0.0
    %231 = vmatpush.xpose.msra.mxu0 0.0
    %232 = vmatpush.xpose.msra.mxu0 0.0
    %233 = vmatpush.xpose.msra.mxu0 0.0
    %234 = vmatpush.xpose.msra.mxu0 0.0
    %235 = vmatpush.xpose.msra.mxu0 0.0
    %236 = vmatpush.xpose.msra.mxu0 0.0
    %237 = vmatpush.xpose.msra.mxu0 0.0
    %238 = vmatpush.xpose.msra.mxu0 0.0
    %239 = vmatpush.xpose.msra.mxu0 0.0
    %240 = vmatpush.xpose.msra.mxu0 0.0
    %241 = vmatpush.xpose.msra.mxu0 %v201
    %242 = vmatpush.xpose.msra.mxu0 %v197
    %243 = vmatmul.f32.gmra.mxu0 %v145
    %v244 = vpop.f32.mrf.mxu0
    %v245 = vadd.f32 %v222, %v244
    %246 = vmatmul.f32.gmra.mxu0 %v148
    %v247 = vpop.f32.mrf.mxu0
    %v248 = vadd.f32 %v225, %v247
    %249 = vdwg.mxu0
    %250 = vmatpush.xpose.msra.mxu0 0.0
    %251 = vmatpush.xpose.msra.mxu0 0.0
    %252 = vmatpush.xpose.msra.mxu0 0.0
    %253 = vmatpush.xpose.msra.mxu0 0.0
    %254 = vmatpush.xpose.msra.mxu0 0.0
    %255 = vmatpush.xpose.msra.mxu0 0.0
    %256 = vmatpush.xpose.msra.mxu0 0.0
    %257 = vmatpush.xpose.msra.mxu0 0.0
    %258 = vmatpush.xpose.msra.mxu0 0.0
    %259 = vmatpush.xpose.msra.mxu0 0.0
    %260 = vmatpush.xpose.msra.mxu0 0.0
    %261 = vmatpush.xpose.msra.mxu0 0.0
    %262 = vmatpush.xpose.msra.mxu0 0.0
    %263 = vmatpush.xpose.msra.mxu0 0.0
    %264 = vmatpush.xpose.msra.mxu0 %v202
    %265 = vmatpush.xpose.msra.mxu0 %v198
    %266 = vmatmul.f32.gmra.mxu0 %v168
    %v267 = vpop.f32.mrf.mxu0
    %v268 = vadd.f32 %v245, %v267
    %269 = vmatmul.f32.gmra.mxu0 %v171
    %v270 = vpop.f32.mrf.mxu0
    %v271 = vadd.f32 %v248, %v270
    %272 = vdwg.mxu0
    %273 = vmatpush.xpose.msra.mxu0 0.0
    %274 = vmatpush.xpose.msra.mxu0 0.0
    %275 = vmatpush.xpose.msra.mxu0 0.0
    %276 = vmatpush.xpose.msra.mxu0 0.0
    %277 = vmatpush.xpose.msra.mxu0 0.0
    %278 = vmatpush.xpose.msra.mxu0 0.0
    %279 = vmatpush.xpose.msra.mxu0 0.0
    %280 = vmatpush.xpose.msra.mxu0 0.0
    %281 = vmatpush.xpose.msra.mxu0 0.0
    %282 = vmatpush.xpose.msra.mxu0 0.0
    %283 = vmatpush.xpose.msra.mxu0 0.0
    %284 = vmatpush.xpose.msra.mxu0 0.0
    %285 = vmatpush.xpose.msra.mxu0 0.0
    %286 = vmatpush.xpose.msra.mxu0 0.0
    %287 = vmatpush.xpose.msra.mxu0 %v203
    %288 = vmatpush.xpose.msra.mxu0 %v199
    %289 = vmatmul.f32.gmra.mxu0 %v191
    %v290 = vpop.f32.mrf.mxu0
    %v291 = vadd.f32 %v268, %v290
    %292 = vmatmul.f32.gmra.mxu0 %v194
    %v293 = vpop.f32.mrf.mxu0
    %v294 = vadd.f32 %v271, %v293
    %295 = vdwg.mxu0
    %v296 = vld [vmem:[%s5] sm:$0x1]
    %v298 = vperm.slane %v296, 0
    %v301 = vsel %vm97, %v291, 0
    %v304 = vsel %vm97, %v294, 0
    %v307 = vsel %vm97, %v40, 0
    %v310 = vsel %vm97, %v41, 0
    %v313 = vsel %vm97, %v42, 0
    %v316 = vsel %vm97, %v43, 0
    %v319 = vsel %vm97, %v44, 0
    %v322 = vsel %vm97, %v45, 0
    %v325 = vsel %vm97, %v46, 0
    %v328 = vsel %vm97, %v47, 0
    %v331 = vsel %vm97, %v48, 0
    %v334 = vsel %vm97, %v49, 0
    %v337 = vsel %vm97, %v50, 0
    %v340 = vsel %vm97, %v51, 0
    %v343 = vsel %vm97, %v52, 0
    %v346 = vsel %vm97, %v53, 0
    %v349 = vsel %vm97, %v54, 0
    %v352 = vsel %vm97, %v55, 0
    %354 = vmatpush.xpose.msra.mxu0 %v352
    %355 = vmatpush.xpose.msra.mxu0 %v349
    %356 = vmatpush.xpose.msra.mxu0 %v346
    %357 = vmatpush.xpose.msra.mxu0 %v343
    %358 = vmatpush.xpose.msra.mxu0 %v340
    %359 = vmatpush.xpose.msra.mxu0 %v337
    %360 = vmatpush.xpose.msra.mxu0 %v334
    %361 = vmatpush.xpose.msra.mxu0 %v331
    %362 = vmatpush.xpose.msra.mxu0 %v328
    %363 = vmatpush.xpose.msra.mxu0 %v325
    %364 = vmatpush.xpose.msra.mxu0 %v322
    %365 = vmatpush.xpose.msra.mxu0 %v319
    %366 = vmatpush.xpose.msra.mxu0 %v316
    %367 = vmatpush.xpose.msra.mxu0 %v313
    %368 = vmatpush.xpose.msra.mxu0 %v310
    %369 = vmatpush.xpose.msra.mxu0 %v307
    %370 = vmatmul.f32.gmra.mxu0 %v301
    %v371 = vpop.f32.mrf.mxu0
    %v372 = vadd.f32 %v298, %v371
    %373 = vmatmul.f32.gmra.mxu0 %v304
    %v374 = vpop.f32.mrf.mxu0
    %v375 = vadd.f32 %v298, %v374
    %376 = vdwg.mxu0
    %377 = vst [vmem:[#allocation5] sm:$0xff] %v372
    %378 = vst [vmem:[#allocation5 + $0x8] sm:$0xff] %v375
    // Predicated region
    $region30: #{tpu_custom_call.1} parent=1 // pred_check
      _
    $region31: #{tpu_custom_call.1} parent=1 // pred_check_branch
      %380 = sbr.rel (0) target = $region33
    $region32: #{tpu_custom_call.1} parent=1 // pred_region
      %382 = vsyncadd [#allocation4], 0
      %s383 = sshll.u32 [#allocation5], 4
      %s384 = int_to_ptr.vmem [resolvable:$true] %s383
      %s385 = sshll.u32 %s6, 4
      %s386 = int_to_ptr.hbm [resolvable:$true] %s385
      %391 = dma.vmem_to_hbm [thread:$0]  %s384, 256, %s386, [#allocation4], 128, 128, 8
    $region33: #{tpu_custom_call.1} parent=1 // pred_fallthru
      _
    // Predicated region
    $region34: #{tpu_custom_call.1} parent=1 // pred_check
      _
    $region35: #{tpu_custom_call.1} parent=1 // pred_check_branch
      %393 = sbr.rel (0) target = $region37
    $region36: #{tpu_custom_call.1} parent=1 // pred_region
      %395 = dma.done [#allocation4], 256
    $region37: #{tpu_custom_call.1} parent=1 // pred_fallthru
      _
    %396 = vsyncpa [#allocation3], 1
    %397 = vsyncpa [#allocation4], 1

</llo_original>
